<compile_context>
chip_gen: v7x
topology: tpu7x:2x2x1
jax: 0.10.0
libtpu: 0.0.40
codegen_flags: <defaults>
</compile_context>

<pallas_src>
import jax
import jax.numpy as jnp
import numpy as np
from jax.experimental import pallas as pl
from jax.experimental.pallas import tpu as pltpu

VOCAB = 12     # output_size
EMB = 128      # emb_size
DROPOUT = 0.3  # unused at eval time


def embed_kernel(idx_ref, table_ref, out_ref):
    """idx_ref: (N, 1) int32, table_ref: (V, E) f32, out_ref: (N, E) f32."""
    N = idx_ref.shape[0]
    V = table_ref.shape[0]
    # One-hot selection matrix built fully vectorized (no per-row slicing):
    # (N, 1) int32 == iota(N, V) -> (N, V) {0,1}.
    onehot = (idx_ref[...] ==
              jax.lax.broadcasted_iota(jnp.int32, (N, V), 1)).astype(jnp.float32)
    # Single MXU matmul performs the gather: exactly one 1.0 per row, so the
    # result equals table[idx] exactly in f32.
    out_ref[...] = jnp.dot(onehot, table_ref[...],
                           preferred_element_type=jnp.float32
                           ).astype(out_ref.dtype)


@jax.jit
def embed_forward(idx, table):
    """idx: (B, S) int32 in [0, VOCAB) -> (B, S, EMB) float32."""
    B, S = idx.shape
    N = B * S
    idx2d = idx.reshape(N, 1).astype(jnp.int32)
    vmem = pl.BlockSpec(memory_space=pltpu.MemorySpace.VMEM)
    out2d = pl.pallas_call(
        embed_kernel,
        out_shape=jax.ShapeDtypeStruct((N, EMB), jnp.float32),
        in_specs=[vmem, vmem],
        out_specs=vmem,
    )(idx2d, table)
    return out2d.reshape(B, S, EMB)


def ref_forward(idx, table):
    """Pure-JAX reference: eval-mode embedding lookup."""
    return table[idx]


if __name__ == "__main__":
    key = jax.random.PRNGKey(0)
    k_idx, k_tab = jax.random.split(key)

    # Small shapes consistent with the module: batch=2, seq=8, vocab=12, emb=128.
    idx = jax.random.randint(k_idx, (2, 8), 0, VOCAB, dtype=jnp.int32)
    # PyTorch nn.Embedding default init ~ N(0, 1).
    table = jax.random.normal(k_tab, (VOCAB, EMB), jnp.float32)

    out = embed_forward(idx, table)
    out = jax.block_until_ready(out)

    assert out.shape == (2, 8, EMB), out.shape

    ref = jax.block_until_ready(ref_forward(idx, table))
    np.testing.assert_allclose(np.asarray(out), np.asarray(ref),
                               rtol=1e-6, atol=1e-6)

    print("KERNEL_OK")
</pallas_src>

<mosaic_0001>
module attributes {stable_mosaic.version = 11 : i64} {
  func.func @embed_kernel(%arg0: memref<16x1xi32, #tpu.memory_space<vmem>>, %arg1: memref<12x128xf32, #tpu.memory_space<vmem>>, %arg2: memref<16x128xf32, #tpu.memory_space<vmem>>) attributes {dimension_semantics = [], scalar_prefetch = 0 : i64, scratch_operands = 0 : i64, tpu.core_type = #tpu.core_type<tc>} {
    %c0 = arith.constant 0 : index
    %c0_0 = arith.constant 0 : index
    %0 = vector.load %arg0[%c0, %c0_0] : memref<16x1xi32, #tpu.memory_space<vmem>>, vector<16x1xi32>
    %1 = tpu.iota {dimensions = array<i32: 1>} : vector<16x12xi32>
    %2 = vector.broadcast %0 : vector<16x1xi32> to vector<16x12xi32>
    %3 = arith.cmpi eq, %2, %1 : vector<16x12xi32>
    %4 = arith.extui %3 : vector<16x12xi1> to vector<16x12xi32>
    %5 = arith.sitofp %4 : vector<16x12xi32> to vector<16x12xf32>
    %c0_1 = arith.constant 0 : index
    %c0_2 = arith.constant 0 : index
    %6 = vector.load %arg1[%c0_1, %c0_2] : memref<12x128xf32, #tpu.memory_space<vmem>>, vector<12x128xf32>
    %cst = arith.constant dense<0.000000e+00> : vector<16x128xf32>
    %7 = tpu.matmul %5, %6, %cst {dimension_numbers = #tpu.dot_dimension_numbers<[1], [0], [0], [1], [0, 0, 1, 1], [], []>} : vector<16x12xf32>, vector<12x128xf32>, vector<16x128xf32> -> vector<16x128xf32>
    %c0_3 = arith.constant 0 : index
    %c0_4 = arith.constant 0 : index
    %8 = vector.load %arg2[%c0_3, %c0_4] : memref<16x128xf32, #tpu.memory_space<vmem>>, vector<16x128xf32>
    tpu.vector_store %arg2[%c0_3, %c0_4], %7 {strides = array<i32>} : memref<16x128xf32, #tpu.memory_space<vmem>>, vector<16x128xf32>,
    return
  }
}

</mosaic_0001>

<llo_original>
// kernel: embed_forward.1
$region0: #{embed_forward.1}
  #allocation0 [shape = 'u32[]', space=smem, size = 0x4, offset = 0x4, fixed_abs, tag = 'smem constant byte address 0x4 - core index']
  #allocation1 [shape = 'u32[144,128]{1,0:T(1,128)}', space=vmem, size = 0x12000, scoped, tag = 'internal scratch']
  %s0 = inlined_call_operand.vmem [shape: s32[16,1], index: 0, kind: input, shape index: {}]
  %s1 = inlined_call_operand.vmem [shape: f32[12,128], index: 1, kind: input, shape index: {}]
  %s2 = inlined_call_operand.hbm [shape: f32[16,128], index: 2, kind: output, shape index: {}]
  %s3 = sld [smem:[#allocation0]]
  $region18: #{embed_forward.1} parent=0
    _
  %s5 = ssub.s32 1, %s3
  %s6 = scalar_select 0, %s5, %s3
  $region1: #{embed_forward.1} parent=0
    #allocation2 [shape = 'u8[8192]{0}', space=vmem, size = 0x2000, scoped, tag = 'output window, operand 0, single buffered']
    #allocation3 [shape = 's32[1]{0}', space=sflag, size = 0x4, scoped, tag = 'scoped memory for embed_forward.1']
    %7 = vsyncpa [#allocation3], 0
    // Predicated region
    $region2: #{embed_forward.1} parent=1 // pred_check
      _
    $region3: #{embed_forward.1} parent=1 // pred_check_branch
      %9 = sbr.rel (0) target = $region5
    $region4: #{embed_forward.1} parent=1 // pred_region
      _
    $region5: #{embed_forward.1} parent=1 // pred_fallthru
      _
    // Predicated region
    $region6: #{embed_forward.1} parent=1 // pred_check
      _
    $region7: #{embed_forward.1} parent=1 // pred_check_branch
      %11 = sbr.rel (0) target = $region9
    $region8: #{embed_forward.1} parent=1 // pred_region
      _
    $region9: #{embed_forward.1} parent=1 // pred_fallthru
      _
    %v12 = vld [vmem:[%s0] sm:$0xff]
    %v13 = vld [vmem:[%s0 + $0x8] sm:$0xff]
    %v14 = vlaneseq
    %v15 = vand.u32 %v14, 127
    %16 = vset.pattern.permute.xlu0 0
    %17 = vperm.xlu0 %16, %v12
    %v18 = vpop.permute.xlu0 %17
    %19 = vset.pattern.permute.xlu0 0
    %20 = vperm.xlu0 %19, %v13
    %v21 = vpop.permute.xlu0 %20
    %vm22 = vcmp.eq.s32.totalorder %v18, %v15
    %vm23 = vcmp.eq.s32.totalorder %v21, %v15
    %v24 = vsel %vm22, 1, 0
    %v25 = vsel %vm23, 1, 0
    %v26 = vcvt.s32.f32 %v24
    %v27 = vcvt.s32.f32 %v25
    %v28 = vld [vmem:[%s1] sm:$0xff]
    %v29 = vld [vmem:[%s1 + $0x8] sm:$0xf]
    %vm30 = vcmask 97280
    %v32 = vsel %vm30, %v26, 0
    %v35 = vsel %vm30, %v27, 0
    %vm37 = vcmask 1043456
    %v39 = vsel %vm37, %v29, 0
    %41 = vmatprep.subr.mxu0 0.0
    %42 = vmatpush1.msra.mxu0 %v28
    %43 = vmatprep.subr.mxu0 0.0
    %44 = vmatpush1.msra.mxu0 %v39
    %45 = vmatprep.subr.mxu0 0.0
    %46 = vmatpush1.msra.mxu0 0.0
    %47 = vmatprep.subr.mxu0 0.0
    %48 = vmatpush1.msra.mxu0 0.0
    %49 = vmatprep.subr.mxu0 0.0
    %50 = vmatpush1.msra.mxu0 0.0
    %51 = vmatprep.subr.mxu0 0.0
    %52 = vmatpush1.msra.mxu0 0.0
    %53 = vmatprep.subr.mxu0 0.0
    %54 = vmatpush1.msra.mxu0 0.0
    %55 = vmatprep.subr.mxu0 0.0
    %56 = vmatpush1.msra.mxu0 0.0
    %57 = vmatprep.subr.mxu0 0.0
    %58 = vmatpush1.msra.mxu0 0.0
    %59 = vmatprep.subr.mxu0 0.0
    %60 = vmatpush1.msra.mxu0 0.0
    %61 = vmatprep.subr.mxu0 0.0
    %62 = vmatpush1.msra.mxu0 0.0
    %63 = vmatprep.subr.mxu0 0.0
    %64 = vmatpush1.msra.mxu0 0.0
    %65 = vmatprep.subr.mxu0 0.0
    %66 = vmatpush1.msra.mxu0 0.0
    %67 = vmatprep.subr.mxu0 0.0
    %68 = vmatpush1.msra.mxu0 0.0
    %69 = vmatprep.subr.mxu0 0.0
    %70 = vmatpush1.msra.mxu0 0.0
    %71 = vmatprep.subr.mxu0 0.0
    %72 = vmatpush1.msra.mxu0 0.0
    %73 = vmatprep.subr.mxu0 0.0
    %74 = vmatpush1.msra.mxu0 0.0
    %75 = vmatprep.subr.mxu0 0.0
    %76 = vmatpush1.msra.mxu0 0.0
    %77 = vmatprep.subr.mxu0 0.0
    %78 = vmatpush1.msra.mxu0 0.0
    %79 = vmatprep.subr.mxu0 0.0
    %80 = vmatpush1.msra.mxu0 0.0
    %81 = vmatprep.subr.mxu0 0.0
    %82 = vmatpush1.msra.mxu0 0.0
    %83 = vmatprep.subr.mxu0 0.0
    %84 = vmatpush1.msra.mxu0 0.0
    %85 = vmatprep.subr.mxu0 0.0
    %86 = vmatpush1.msra.mxu0 0.0
    %87 = vmatprep.subr.mxu0 0.0
    %88 = vmatpush1.msra.mxu0 0.0
    %89 = vmatprep.subr.mxu0 0.0
    %90 = vmatpush1.msra.mxu0 0.0
    %91 = vmatprep.subr.mxu0 0.0
    %92 = vmatpush1.msra.mxu0 0.0
    %93 = vmatprep.subr.mxu0 0.0
    %94 = vmatpush1.msra.mxu0 0.0
    %95 = vmatprep.subr.mxu0 0.0
    %96 = vmatpush1.msra.mxu0 0.0
    %97 = vmatprep.subr.mxu0 0.0
    %98 = vmatpush1.msra.mxu0 0.0
    %99 = vmatprep.subr.mxu0 0.0
    %100 = vmatpush1.msra.mxu0 0.0
    %101 = vmatprep.subr.mxu0 0.0
    %102 = vmatpush1.msra.mxu0 0.0
    %103 = vmatprep.subr.mxu0 0.0
    %104 = vmatpush1.msra.mxu0 0.0
    %105 = vmatprep.mubr.f32.mxu0 0.0
    %106 = vmatmul.mubr.f32.gmra.mrb[0].mxu0 %v32
    %v107 = vpop.f32.mrb[0].mxu0
    %v108 = vadd.f32 0.0, %v107
    %v109 = vpop.f32.mrb[0].mxu0
    %110 = vmatprep.mubr.f32.mxu0 0.0
    %111 = vmatmul.mubr.f32.gmra.mrb[0].mxu0 %v35
    %v112 = vpop.f32.mrb[0].mxu0
    %v113 = vadd.f32 0.0, %v112
    %v114 = vpop.f32.mrb[0].mxu0
    %115 = vdwg.mxu0
    %116 = vst [vmem:[#allocation2] sm:$0xff] %v108
    %117 = vst [vmem:[#allocation2 + $0x8] sm:$0xff] %v113
    // Predicated region
    $region10: #{embed_forward.1} parent=1 // pred_check
      _
    $region11: #{embed_forward.1} parent=1 // pred_check_branch
      %119 = sbr.rel (0) target = $region13
    $region12: #{embed_forward.1} parent=1 // pred_region
      %s121 = ssub.s32 256, 256
      %122 = vsyncadd [#allocation3], %s121
      %s123 = sshll.u32 [#allocation2], 4
      %s124 = int_to_ptr.vmem [resolvable:$true] %s123
      %129 = dma.vmem_to_hbm [thread:$0]  %s124, 256, %s2, [#allocation3], 128, 128, 8
    $region13: #{embed_forward.1} parent=1 // pred_fallthru
      _
    // Predicated region
    $region14: #{embed_forward.1} parent=1 // pred_check
      _
    $region15: #{embed_forward.1} parent=1 // pred_check_branch
      %131 = sbr.rel (0) target = $region17
    $region16: #{embed_forward.1} parent=1 // pred_region
      %132 = dma.done [#allocation3], 256
    $region17: #{embed_forward.1} parent=1 // pred_fallthru
      _
    %133 = vsyncpa [#allocation3], 1

</llo_original>
